<compile_context>
chip_gen: v6e
topology: v6e:2x2x1
jax: 0.10.0
libtpu: 0.0.40
codegen_flags: <defaults>
</compile_context>

<pallas_src>
import jax
import jax.numpy as jnp
from jax.experimental import pallas as pl
from jax.experimental.pallas import tpu as pltpu


def _make_combine_kernel(B, ND, Cp, Cd, HW):
    cp_w = Cp * HW            # lane width of repeated point channels
    ct_w = (Cd - 2) * HW      # lane width of trimmed directional channels

    def kernel(point_ref, dir_ref, out_ref):
        # point_ref : (B, Cp*HW)
        # dir_ref   : (B*ND, Cd*HW)   (untrimmed; 1:-1 trim is the lane slice below)
        # out_ref   : (B*ND, (Cp + Cd-2)*HW)
        out_dtype = out_ref.dtype

        # Trimmed directional channels: one lane-aligned, unmasked full-width store.
        out_ref[:, cp_w:cp_w + ct_w] = dir_ref[:, HW:HW + ct_w].astype(out_dtype)

        # Repeated point channels: load each batch row once, store its ND copies.
        for b in range(B):  # static unroll (B is tiny)
            p = point_ref[pl.ds(b, 1), :]                          # (1, Cp*HW)
            out_ref[pl.ds(b * ND, ND), :cp_w] = jnp.broadcast_to(
                p, (ND, cp_w)
            ).astype(out_dtype)

    return kernel


def format_directional_input(point_encoded, dir_encoded, combine=False):
    """Pallas/JAX implementation of FormatDirectionalInput.forward."""
    B, Cp, H, W = point_encoded.shape
    Bd, ND, Cd, Hd, Wd = dir_encoded.shape
    assert (B, H, W) == (Bd, Hd, Wd) and ND == 4
    assert Cd > 2, "need at least one directional channel after the 1:-1 trim"
    HW = H * W
    Ct = Cd - 2

    if not combine:
        # Pure slice + reshape with zero FLOPs: strictly cheaper as a plain XLA op
        # (single copy at most, fuses with consumers) than a standalone custom call.
        return dir_encoded[:, :, 1:-1, :, :].reshape(B, ND * Ct, H, W)

    out_dtype = jnp.result_type(point_encoded.dtype, dir_encoded.dtype)
    c_out = Cp + Ct

    # Contiguous (free) reshapes folding the channel axes into the lane axis.
    point_2d = point_encoded.reshape(B, Cp * HW)
    dir_2d = dir_encoded.reshape(B * ND, Cd * HW)

    out_2d = pl.pallas_call(
        _make_combine_kernel(B, ND, Cp, Cd, HW),
        out_shape=jax.ShapeDtypeStruct((B * ND, c_out * HW), out_dtype),
        # No grid: one fat step, whole arrays resident in VMEM, one DMA each.
        in_specs=[
            pl.BlockSpec(memory_space=pltpu.MemorySpace.VMEM),
            pl.BlockSpec(memory_space=pltpu.MemorySpace.VMEM),
        ],
        out_specs=pl.BlockSpec(memory_space=pltpu.MemorySpace.VMEM),
    )(point_2d, dir_2d)

    # (B*4, c_out*HW) -> (B, 4*c_out, H, W): contiguous reshape, no data movement.
    return out_2d.reshape(B, ND * c_out, H, W)


def _reference(point_encoded, dir_encoded, combine=False):
    """Pure-JAX replica of the PyTorch forward for verification."""
    dir_enc = dir_encoded[:, :, 1:-1, :, :]
    if combine:
        pt = jnp.repeat(point_encoded[:, None], 4, axis=1)
        dir_enc = jnp.concatenate([pt, dir_enc], axis=2)
    B, ND, C, H, W = dir_enc.shape
    return dir_enc.reshape(B, ND * C, H, W)


if __name__ == "__main__":
    # Small, deterministic inputs. board_size = 16 -> H = W = 16, HW = 256 (= 2*128).
    B, Cp, Cd, H, W = 2, 3, 6, 16, 16
    key = jax.random.PRNGKey(0)
    k1, k2 = jax.random.split(key)
    point_encoded = jax.random.normal(k1, (B, Cp, H, W), dtype=jnp.float32)
    dir_encoded = jax.random.normal(k2, (B, 4, Cd, H, W), dtype=jnp.float32)

    # combine = True path (Pallas kernel).
    out_c = format_directional_input(point_encoded, dir_encoded, combine=True)
    out_c = jax.block_until_ready(out_c)
    ref_c = _reference(point_encoded, dir_encoded, combine=True)
    assert out_c.shape == (B, 4 * (Cp + Cd - 2), H, W)
    assert jnp.allclose(out_c, ref_c)

    # combine = False path (plain slice + reshape, per perf review).
    out_n = format_directional_input(point_encoded, dir_encoded, combine=False)
    out_n = jax.block_until_ready(out_n)
    ref_n = _reference(point_encoded, dir_encoded, combine=False)
    assert out_n.shape == (B, 4 * (Cd - 2), H, W)
    assert jnp.allclose(out_n, ref_n)

    print("KERNEL_OK")
</pallas_src>

<mosaic_0001>
module attributes {stable_mosaic.version = 11 : i64} {
  func.func @kernel(%arg0: memref<2x768xf32, #tpu.memory_space<vmem>>, %arg1: memref<8x1536xf32, #tpu.memory_space<vmem>>, %arg2: memref<8x1792xf32, #tpu.memory_space<vmem>>) attributes {dimension_semantics = [], scalar_prefetch = 0 : i64, scratch_operands = 0 : i64, tpu.core_type = #tpu.core_type<tc>} {
    %c0 = arith.constant 0 : index
    %c256 = arith.constant 256 : index
    %0 = vector.load %arg1[%c0, %c256] : memref<8x1536xf32, #tpu.memory_space<vmem>>, vector<8x1024xf32>
    %c0_0 = arith.constant 0 : index
    %c768 = arith.constant 768 : index
    %1 = vector.load %arg2[%c0_0, %c768] : memref<8x1792xf32, #tpu.memory_space<vmem>>, vector<8x1024xf32>
    tpu.vector_store %arg2[%c0_0, %c768], %0 {strides = array<i32>} : memref<8x1792xf32, #tpu.memory_space<vmem>>, vector<8x1024xf32>,
    %c0_1 = arith.constant 0 : index
    %c0_2 = arith.constant 0 : index
    %2 = vector.load %arg0[%c0_1, %c0_2] : memref<2x768xf32, #tpu.memory_space<vmem>>, vector<1x768xf32>
    %3 = vector.shape_cast %2 : vector<1x768xf32> to vector<1x768xf32>
    %4 = vector.broadcast %3 : vector<1x768xf32> to vector<4x768xf32>
    %c0_3 = arith.constant 0 : index
    %c0_4 = arith.constant 0 : index
    %5 = vector.load %arg2[%c0_3, %c0_4] : memref<8x1792xf32, #tpu.memory_space<vmem>>, vector<4x768xf32>
    tpu.vector_store %arg2[%c0_3, %c0_4], %4 {strides = array<i32>} : memref<8x1792xf32, #tpu.memory_space<vmem>>, vector<4x768xf32>,
    %c1 = arith.constant 1 : index
    %c0_5 = arith.constant 0 : index
    %6 = vector.load %arg0[%c1, %c0_5] : memref<2x768xf32, #tpu.memory_space<vmem>>, vector<1x768xf32>
    %7 = vector.shape_cast %6 : vector<1x768xf32> to vector<1x768xf32>
    %8 = vector.broadcast %7 : vector<1x768xf32> to vector<4x768xf32>
    %c4 = arith.constant 4 : index
    %c0_6 = arith.constant 0 : index
    %9 = vector.load %arg2[%c4, %c0_6] : memref<8x1792xf32, #tpu.memory_space<vmem>>, vector<4x768xf32>
    tpu.vector_store %arg2[%c4, %c0_6], %8 {strides = array<i32>} : memref<8x1792xf32, #tpu.memory_space<vmem>>, vector<4x768xf32>,
    return
  }
}

</mosaic_0001>

<llo_original>
// kernel: tpu_custom_call.1
$region0: #{tpu_custom_call.1}
  #allocation0 [shape = 'u32[]', space=smem, size = 0x4, offset = 0x4, fixed_abs, tag = 'smem constant byte address 0x4 - core index']
  #allocation1 [shape = 'u32[144,128]{1,0:T(1,128)}', space=vmem, size = 0x12000, scoped, tag = 'internal scratch']
  %s0 = inlined_call_operand.hbm [shape: f32[2,768], index: 0, kind: input, shape index: {}]
  %s1 = inlined_call_operand.hbm [shape: f32[8,1536], index: 1, kind: input, shape index: {}]
  %s2 = inlined_call_operand.hbm [shape: f32[8,1792], index: 2, kind: output, shape index: {}]
  %s3 = sld [smem:[#allocation0]]
  $region26: #{tpu_custom_call.1} parent=0
    _
  %s5 = ssub.s32 1, %s3
  %s6 = scalar_select 0, %s5, %s3
  $region1: #{tpu_custom_call.1} parent=0
    #allocation2 [shape = 'u8[6144]{0}', space=vmem, size = 0x1800, scoped, tag = 'input window, operand 0, single buffered']
    #allocation3 [shape = 's32[1]{0}', space=sflag, size = 0x4, scoped, tag = 'scoped memory for tpu_custom_call.1']
    #allocation4 [shape = 's32[1]{0}', space=sflag, size = 0x4, scoped, tag = 'scoped memory for tpu_custom_call.1']
    #allocation5 [shape = 'u8[49152]{0}', space=vmem, size = 0xc000, scoped, tag = 'input window, operand 1, single buffered']
    #allocation6 [shape = 's32[1]{0}', space=sflag, size = 0x4, scoped, tag = 'scoped memory for tpu_custom_call.1']
    #allocation7 [shape = 'u8[57344]{0}', space=vmem, size = 0xe000, scoped, tag = 'output window, operand 0, single buffered']
    %7 = vsyncpa [#allocation3], 0
    %8 = vsyncpa [#allocation6], 0
    %9 = vsyncpa [#allocation4], 0
    // Predicated region
    $region2: #{tpu_custom_call.1} parent=1 // pred_check
      _
    $region3: #{tpu_custom_call.1} parent=1 // pred_check_branch
      %11 = sbr.rel (0) target = $region5
    $region4: #{tpu_custom_call.1} parent=1 // pred_region
      %s13 = ssub.s32 192, 192
      %14 = vsyncadd [#allocation3], %s13
      %s16 = sshll.u32 [#allocation2], 4
      %s17 = int_to_ptr.vmem [resolvable:$true] %s16
      %19 = dma.hbm_to_vmem [thread:$0]  %s0, 192, %s17, [#allocation3]
    $region5: #{tpu_custom_call.1} parent=1 // pred_fallthru
      _
    // Predicated region
    $region6: #{tpu_custom_call.1} parent=1 // pred_check
      _
    $region7: #{tpu_custom_call.1} parent=1 // pred_check_branch
      %21 = sbr.rel (0) target = $region9
    $region8: #{tpu_custom_call.1} parent=1 // pred_region
      %s23 = ssub.s32 1536, 1536
      %24 = vsyncadd [#allocation6], %s23
      %s26 = sshll.u32 [#allocation5], 4
      %s27 = int_to_ptr.vmem [resolvable:$true] %s26
      %29 = dma.hbm_to_vmem [thread:$0]  %s1, 1536, %s27, [#allocation6]
    $region9: #{tpu_custom_call.1} parent=1 // pred_fallthru
      _
    // Predicated region
    $region10: #{tpu_custom_call.1} parent=1 // pred_check
      _
    $region11: #{tpu_custom_call.1} parent=1 // pred_check_branch
      %31 = sbr.rel (0) target = $region13
    $region12: #{tpu_custom_call.1} parent=1 // pred_region
      %32 = dma.done [#allocation3], 192
    $region13: #{tpu_custom_call.1} parent=1 // pred_fallthru
      _
    // Predicated region
    $region14: #{tpu_custom_call.1} parent=1 // pred_check
      _
    $region15: #{tpu_custom_call.1} parent=1 // pred_check_branch
      %34 = sbr.rel (0) target = $region17
    $region16: #{tpu_custom_call.1} parent=1 // pred_region
      %35 = dma.done [#allocation6], 1536
    $region17: #{tpu_custom_call.1} parent=1 // pred_fallthru
      _
    %v36 = vld [vmem:[#allocation5 + $0x10] sm:$0xff]
    %v37 = vld [vmem:[#allocation5 + $0x18] sm:$0xff]
    %v38 = vld [vmem:[#allocation5 + $0x20] sm:$0xff]
    %v39 = vld [vmem:[#allocation5 + $0x28] sm:$0xff]
    %v40 = vld [vmem:[#allocation5 + $0x30] sm:$0xff]
    %v41 = vld [vmem:[#allocation5 + $0x38] sm:$0xff]
    %v42 = vld [vmem:[#allocation5 + $0x40] sm:$0xff]
    %v43 = vld [vmem:[#allocation5 + $0x48] sm:$0xff]
    %44 = vst [vmem:[#allocation7 + $0x30] sm:$0xff] %v36
    %45 = vst [vmem:[#allocation7 + $0x38] sm:$0xff] %v37
    %46 = vst [vmem:[#allocation7 + $0x40] sm:$0xff] %v38
    %47 = vst [vmem:[#allocation7 + $0x48] sm:$0xff] %v39
    %48 = vst [vmem:[#allocation7 + $0x50] sm:$0xff] %v40
    %49 = vst [vmem:[#allocation7 + $0x58] sm:$0xff] %v41
    %50 = vst [vmem:[#allocation7 + $0x60] sm:$0xff] %v42
    %51 = vst [vmem:[#allocation7 + $0x68] sm:$0xff] %v43
    %v52 = vld [vmem:[#allocation2] ss:$2 sm:$0x3f]
    %v54 = vlaneseq
    %v55 = vshrl.u32 %v54, 7
    %v56 = vsub.s32 0, %v55
    %v57 = vrot.slane %v52, %v56
    %v58 = vlaneseq
    %v59 = vshrl.u32 %v58, 7
    %v60 = vsub.s32 1, %v59
    %v61 = vrot.slane %v52, %v60
    %v62 = vlaneseq
    %v63 = vshrl.u32 %v62, 7
    %v64 = vsub.s32 2, %v63
    %v65 = vrot.slane %v52, %v64
    %v66 = vlaneseq
    %v67 = vshrl.u32 %v66, 7
    %v68 = vsub.s32 3, %v67
    %v69 = vrot.slane %v52, %v68
    %v70 = vlaneseq
    %v71 = vshrl.u32 %v70, 7
    %v72 = vsub.s32 4, %v71
    %v73 = vrot.slane %v52, %v72
    %v74 = vlaneseq
    %v75 = vshrl.u32 %v74, 7
    %v76 = vsub.s32 5, %v75
    %v77 = vrot.slane %v52, %v76
    %84 = vst [vmem:[#allocation7] sm:$0xf] %v57
    %85 = vst [vmem:[#allocation7 + $0x8] sm:$0xf] %v61
    %86 = vst [vmem:[#allocation7 + $0x10] sm:$0xf] %v65
    %87 = vst [vmem:[#allocation7 + $0x18] sm:$0xf] %v69
    %88 = vst [vmem:[#allocation7 + $0x20] sm:$0xf] %v73
    %89 = vst [vmem:[#allocation7 + $0x28] sm:$0xf] %v77
    %s90 = scalar_lea.vmem [#allocation2], 1
    %v91 = vld [vmem:[%s90] ss:$2 sm:$0x3f]
    %v93 = vlaneseq
    %v94 = vshrl.u32 %v93, 7
    %v95 = vsub.s32 0, %v94
    %v96 = vrot.slane %v91, %v95
    %v97 = vlaneseq
    %v98 = vshrl.u32 %v97, 7
    %v99 = vsub.s32 1, %v98
    %v100 = vrot.slane %v91, %v99
    %v101 = vlaneseq
    %v102 = vshrl.u32 %v101, 7
    %v103 = vsub.s32 2, %v102
    %v104 = vrot.slane %v91, %v103
    %v105 = vlaneseq
    %v106 = vshrl.u32 %v105, 7
    %v107 = vsub.s32 3, %v106
    %v108 = vrot.slane %v91, %v107
    %v109 = vlaneseq
    %v110 = vshrl.u32 %v109, 7
    %v111 = vsub.s32 4, %v110
    %v112 = vrot.slane %v91, %v111
    %v113 = vlaneseq
    %v114 = vshrl.u32 %v113, 7
    %v115 = vsub.s32 5, %v114
    %v116 = vrot.slane %v91, %v115
    %123 = vst [vmem:[#allocation7] sm:$0xf0] %v96
    %124 = vst [vmem:[#allocation7 + $0x8] sm:$0xf0] %v100
    %125 = vst [vmem:[#allocation7 + $0x10] sm:$0xf0] %v104
    %126 = vst [vmem:[#allocation7 + $0x18] sm:$0xf0] %v108
    %127 = vst [vmem:[#allocation7 + $0x20] sm:$0xf0] %v112
    %128 = vst [vmem:[#allocation7 + $0x28] sm:$0xf0] %v116
    // Predicated region
    $region18: #{tpu_custom_call.1} parent=1 // pred_check
      _
    $region19: #{tpu_custom_call.1} parent=1 // pred_check_branch
      %130 = sbr.rel (0) target = $region21
    $region20: #{tpu_custom_call.1} parent=1 // pred_region
      %s132 = ssub.s32 1792, 1792
      %133 = vsyncadd [#allocation4], %s132
      %s135 = sshll.u32 [#allocation7], 4
      %s136 = int_to_ptr.vmem [resolvable:$true] %s135
      %138 = dma.vmem_to_hbm [thread:$0]  %s136, 1792, %s2, [#allocation4]
    $region21: #{tpu_custom_call.1} parent=1 // pred_fallthru
      _
    // Predicated region
    $region22: #{tpu_custom_call.1} parent=1 // pred_check
      _
    $region23: #{tpu_custom_call.1} parent=1 // pred_check_branch
      %140 = sbr.rel (0) target = $region25
    $region24: #{tpu_custom_call.1} parent=1 // pred_region
      %141 = dma.done [#allocation4], 1792
    $region25: #{tpu_custom_call.1} parent=1 // pred_fallthru
      _
    %142 = vsyncpa [#allocation3], 1
    %143 = vsyncpa [#allocation6], 1
    %144 = vsyncpa [#allocation4], 1

</llo_original>
